<compile_context>
chip_gen: v7x
topology: tpu7x:2x2x1
jax: 0.10.0
libtpu: 0.0.40
codegen_flags: <defaults>
</compile_context>

<pallas_src>
import functools

import jax
import jax.numpy as jnp
from jax import lax
from jax.experimental import pallas as pl
from jax.experimental.pallas import tpu as pltpu

EPS = 1e-5
_LANES = 128
_TARGET_BLOCK_BYTES = 2 << 20   # ~2 MiB per block: >=85% of measured HBM roofline
_VMEM_LIMIT_BYTES = 48 << 20    # above default scoped limit, below v7x 64 MiB physical


def _make_ln_kernel(has_bias, seg_hidden):
    """Build a LayerNorm kernel body.

    seg_hidden=None -> normalize over the whole last dim of the block.
    seg_hidden=h    -> the last dim packs `fold` independent logical rows of
                       width h; per-segment sums come from a block-diagonal
                       ones matmul (MXU) so the layout stays 128-lane dense.
    """

    def kernel(*refs):
        if seg_hidden is None:
            if has_bias:
                x_ref, w_ref, b_ref, o_ref = refs
            else:
                x_ref, w_ref, o_ref = refs
                b_ref = None
            m_ref = None
        else:
            if has_bias:
                x_ref, w_ref, b_ref, m_ref, o_ref = refs
            else:
                x_ref, w_ref, m_ref, o_ref = refs
                b_ref = None

        x = x_ref[...].astype(jnp.float32)
        if seg_hidden is None:
            inv_h = 1.0 / x.shape[-1]
            # single pass: E[x] and E[x^2] (one fewer cross-lane XLU reduction)
            mean = jnp.sum(x, axis=-1, keepdims=True) * inv_h
            ex2 = jnp.sum(x * x, axis=-1, keepdims=True) * inv_h
        else:
            inv_h = 1.0 / seg_hidden
            m = m_ref[...]  # (H, H) block-diagonal ones (f32): segment-sum matrix
            mean = jnp.dot(x, m, preferred_element_type=jnp.float32) * inv_h
            ex2 = jnp.dot(x * x, m, preferred_element_type=jnp.float32) * inv_h
        var = jnp.maximum(ex2 - mean * mean, 0.0)   # clamp: guard rsqrt of -eps
        y = (x - mean) * lax.rsqrt(var + EPS)       # rsqrt -> EUP slot (free)
        y = y * w_ref[...].astype(jnp.float32)
        if has_bias:
            y = y + b_ref[...].astype(jnp.float32)
        o_ref[...] = y.astype(o_ref.dtype)

    return kernel


def _choose_tile_rows(rows, bytes_per_row, *, min_grid_steps=4):
    """Largest multiple-of-8 row tile near the target block bytes, while keeping
    a few grid steps for megacore / 2-TC load balance on large inputs."""
    tile = max(8, (_TARGET_BLOCK_BYTES // max(bytes_per_row, 1)) // 8 * 8)
    balanced = max(8, (pl.cdiv(rows, min_grid_steps) + 7) // 8 * 8)
    return min(tile, balanced)


def layer_norm(x, weight, bias=None):
    """LayerNorm over the last dim of `x` (F.layer_norm semantics, eps=1e-5).

    bias=None reproduces the `bias=False` branch of the PyTorch module
    (no zero-bias tensor is materialized or streamed).
    """
    orig_shape = x.shape
    hidden = orig_shape[-1]
    assert weight.shape == (hidden,)
    has_bias = bias is not None

    rows = 1
    for d in orig_shape[:-1]:
        rows *= int(d)
    x2 = x.reshape(rows, hidden)

    # Repack small hidden dims into a lane-dense (128-wide) last axis.
    fold = 1
    if hidden < _LANES and _LANES % hidden == 0 and rows % (_LANES // hidden) == 0:
        fold = _LANES // hidden

    inputs = []
    if fold > 1:
        hf = fold * hidden
        rows_k = rows // fold
        xk = x2.reshape(rows_k, hf)                    # contiguous regroup (free)
        inputs += [xk, jnp.tile(weight, fold).reshape(1, hf)]
        if has_bias:
            inputs.append(jnp.tile(bias, fold).reshape(1, hf))
        r = lax.broadcasted_iota(jnp.int32, (hf, hf), 0) // hidden
        c = lax.broadcasted_iota(jnp.int32, (hf, hf), 1) // hidden
        inputs.append((r == c).astype(jnp.float32))    # block-diagonal ones
        seg_hidden = hidden
        block_h = hf
    else:
        rows_k = rows
        inputs += [x2, weight.reshape(1, hidden)]
        if has_bias:
            inputs.append(bias.reshape(1, hidden))
        seg_hidden = None
        block_h = hidden

    itemsize = jnp.dtype(x.dtype).itemsize
    tile_rows = _choose_tile_rows(rows_k, block_h * itemsize)
    grid = (pl.cdiv(rows_k, tile_rows),)   # partial last block: masked by Pallas

    in_specs = [
        pl.BlockSpec((tile_rows, block_h), lambda i: (i, 0)),   # x
        pl.BlockSpec((1, block_h), lambda i: (0, 0)),           # weight
    ]
    if has_bias:
        in_specs.append(pl.BlockSpec((1, block_h), lambda i: (0, 0)))   # bias
    if fold > 1:
        in_specs.append(pl.BlockSpec((block_h, block_h), lambda i: (0, 0)))  # M

    out = pl.pallas_call(
        _make_ln_kernel(has_bias, seg_hidden),
        out_shape=jax.ShapeDtypeStruct((rows_k, block_h), x.dtype),
        grid_spec=pltpu.PrefetchScalarGridSpec(
            num_scalar_prefetch=0,
            grid=grid,
            in_specs=in_specs,
            out_specs=pl.BlockSpec((tile_rows, block_h), lambda i: (i, 0)),
        ),
        compiler_params=pltpu.CompilerParams(
            dimension_semantics=("parallel",),
            vmem_limit_bytes=_VMEM_LIMIT_BYTES,
        ),
    )(*inputs)

    return out.reshape(orig_shape)


def _ref_layer_norm(x, weight, bias=None):
    xf = x.astype(jnp.float32)
    mean = jnp.mean(xf, axis=-1, keepdims=True)
    var = jnp.mean((xf - mean) ** 2, axis=-1, keepdims=True)
    y = (xf - mean) * lax.rsqrt(var + EPS) * weight.astype(jnp.float32)
    if bias is not None:
        y = y + bias.astype(jnp.float32)
    return y.astype(x.dtype)


if __name__ == "__main__":
    key = jax.random.PRNGKey(0)
    batch, seq = 2, 8
    k0, k1, k2 = jax.random.split(key, 3)

    checks = []

    # hidden=32 -> exercises the lane-dense repack (fold=4) path.
    hidden = 32
    x_small = jax.random.normal(k0, (batch, seq, hidden), dtype=jnp.float32)
    # module __init__: weight = ones(ndim), bias = zeros(ndim) (bias=True branch)
    w_small = jnp.ones((hidden,), dtype=jnp.float32)
    b_small = jnp.zeros((hidden,), dtype=jnp.float32)
    checks.append((x_small, w_small, b_small))
    checks.append((x_small, w_small, None))          # bias=False branch

    # hidden=128 -> standard lane-dense path, non-trivial affine params.
    hidden = 128
    x_big = jax.random.normal(k1, (batch, seq, hidden), dtype=jnp.float32)
    w_big = 1.0 + 0.1 * jax.random.normal(k2, (hidden,), dtype=jnp.float32)
    b_big = 0.1 * jax.random.normal(jax.random.fold_in(k2, 1), (hidden,),
                                    dtype=jnp.float32)
    checks.append((x_big, w_big, b_big))
    checks.append((x_big, w_big, None))

    for xi, wi, bi in checks:
        y = jax.block_until_ready(layer_norm(xi, wi, bi))
        ref = _ref_layer_norm(xi, wi, bi)
        assert y.shape == xi.shape and y.dtype == xi.dtype
        assert jnp.allclose(y, ref, atol=2e-5, rtol=2e-5), (
            f"mismatch vs reference: shape={xi.shape}, bias={bi is not None}")

    print("KERNEL_OK")
</pallas_src>

<mosaic_0001>
module attributes {stable_mosaic.version = 11 : i64} {
  func.func @kernel(%arg0: i32, %arg1: memref<8x128xf32, #tpu.memory_space<vmem>>, %arg2: memref<1x128xf32, #tpu.memory_space<vmem>>, %arg3: memref<1x128xf32, #tpu.memory_space<vmem>>, %arg4: memref<128x128xf32, #tpu.memory_space<vmem>>, %arg5: memref<8x128xf32, #tpu.memory_space<vmem>>) attributes {dimension_semantics = [#tpu.dimension_semantics<parallel>], iteration_bounds = array<i64: 1>, scalar_prefetch = 0 : i64, scratch_operands = 0 : i64, tpu.core_type = #tpu.core_type<tc>, window_params = [{transform_indices = @transform_0, window_bounds = array<i64: 8, 128>}, {pipeline_mode = #tpu.pipeline_mode<synchronous>, transform_indices = @transform_1, window_bounds = array<i64: 1, 128>}, {pipeline_mode = #tpu.pipeline_mode<synchronous>, transform_indices = @transform_2, window_bounds = array<i64: 1, 128>}, {pipeline_mode = #tpu.pipeline_mode<synchronous>, transform_indices = @transform_3, window_bounds = array<i64: 128, 128>}, {transform_indices = @transform_4, window_bounds = array<i64: 8, 128>}]} {
    %c0 = arith.constant 0 : index
    %c0_0 = arith.constant 0 : index
    %0 = vector.load %arg1[%c0, %c0_0] : memref<8x128xf32, #tpu.memory_space<vmem>>, vector<8x128xf32>
    %c0_1 = arith.constant 0 : index
    %c0_2 = arith.constant 0 : index
    %1 = vector.load %arg4[%c0_1, %c0_2] : memref<128x128xf32, #tpu.memory_space<vmem>>, vector<128x128xf32>
    %cst = arith.constant dense<0.000000e+00> : vector<8x128xf32>
    %2 = tpu.matmul %0, %1, %cst {dimension_numbers = #tpu.dot_dimension_numbers<[1], [0], [0], [1], [0, 0, 1, 1], [], []>} : vector<8x128xf32>, vector<128x128xf32>, vector<8x128xf32> -> vector<8x128xf32>
    %cst_3 = arith.constant 3.125000e-02 : f32
    %3 = vector.broadcast %cst_3 : f32 to vector<8x128xf32>
    %4 = arith.mulf %2, %3 : vector<8x128xf32>
    %5 = arith.mulf %0, %0 : vector<8x128xf32>
    %cst_4 = arith.constant dense<0.000000e+00> : vector<8x128xf32>
    %6 = tpu.matmul %5, %1, %cst_4 {dimension_numbers = #tpu.dot_dimension_numbers<[1], [0], [0], [1], [0, 0, 1, 1], [], []>} : vector<8x128xf32>, vector<128x128xf32>, vector<8x128xf32> -> vector<8x128xf32>
    %cst_5 = arith.constant 3.125000e-02 : f32
    %7 = vector.broadcast %cst_5 : f32 to vector<8x128xf32>
    %8 = arith.mulf %6, %7 : vector<8x128xf32>
    %9 = arith.mulf %4, %4 : vector<8x128xf32>
    %10 = arith.subf %8, %9 : vector<8x128xf32>
    %cst_6 = arith.constant 0.000000e+00 : f32
    %11 = vector.broadcast %cst_6 : f32 to vector<8x128xf32>
    %12 = arith.maximumf %10, %11 : vector<8x128xf32>
    %13 = arith.subf %0, %4 : vector<8x128xf32>
    %cst_7 = arith.constant 9.99999974E-6 : f32
    %14 = vector.broadcast %cst_7 : f32 to vector<8x128xf32>
    %15 = arith.addf %12, %14 : vector<8x128xf32>
    %16 = math.rsqrt %15 : vector<8x128xf32>
    %17 = arith.mulf %13, %16 : vector<8x128xf32>
    %c0_8 = arith.constant 0 : index
    %c0_9 = arith.constant 0 : index
    %18 = vector.load %arg2[%c0_8, %c0_9] : memref<1x128xf32, #tpu.memory_space<vmem>>, vector<1x128xf32>
    %19 = vector.broadcast %18 : vector<1x128xf32> to vector<8x128xf32>
    %20 = arith.mulf %17, %19 : vector<8x128xf32>
    %c0_10 = arith.constant 0 : index
    %c0_11 = arith.constant 0 : index
    %21 = vector.load %arg3[%c0_10, %c0_11] : memref<1x128xf32, #tpu.memory_space<vmem>>, vector<1x128xf32>
    %22 = vector.broadcast %21 : vector<1x128xf32> to vector<8x128xf32>
    %23 = arith.addf %20, %22 : vector<8x128xf32>
    %c0_12 = arith.constant 0 : index
    %c0_13 = arith.constant 0 : index
    %24 = vector.load %arg5[%c0_12, %c0_13] : memref<8x128xf32, #tpu.memory_space<vmem>>, vector<8x128xf32>
    tpu.vector_store %arg5[%c0_12, %c0_13], %23 {strides = array<i32>} : memref<8x128xf32, #tpu.memory_space<vmem>>, vector<8x128xf32>,
    return
  }
  func.func @transform_0(%arg0: i32) -> (i32, i32) {
    %c0_i32 = arith.constant 0 : i32
    %c0_i32_0 = arith.constant 0 : i32
    return %arg0, %c0_i32 : i32, i32
  }
  func.func @transform_1(%arg0: i32) -> (i32, i32) {
    %c0_i32 = arith.constant 0 : i32
    %c0_i32_0 = arith.constant 0 : i32
    %c0_i32_1 = arith.constant 0 : i32
    return %c0_i32, %c0_i32_0 : i32, i32
  }
  func.func @transform_2(%arg0: i32) -> (i32, i32) {
    %c0_i32 = arith.constant 0 : i32
    %c0_i32_0 = arith.constant 0 : i32
    %c0_i32_1 = arith.constant 0 : i32
    return %c0_i32, %c0_i32_0 : i32, i32
  }
  func.func @transform_3(%arg0: i32) -> (i32, i32) {
    %c0_i32 = arith.constant 0 : i32
    %c0_i32_0 = arith.constant 0 : i32
    %c0_i32_1 = arith.constant 0 : i32
    return %c0_i32, %c0_i32_0 : i32, i32
  }
  func.func @transform_4(%arg0: i32) -> (i32, i32) {
    %c0_i32 = arith.constant 0 : i32
    %c0_i32_0 = arith.constant 0 : i32
    return %arg0, %c0_i32 : i32, i32
  }
}

</mosaic_0001>

<llo_original>
// kernel: tpu_custom_call.1
$region0: #{tpu_custom_call.1}
  #allocation0 [shape = 'u32[]', space=smem, size = 0x4, offset = 0x4, fixed_abs, tag = 'smem constant byte address 0x4 - core index']
  #allocation1 [shape = 'u32[144,128]{1,0:T(1,128)}', space=vmem, size = 0x12000, scoped, tag = 'internal scratch']
  %s0 = inlined_call_operand.hbm [shape: f32[4,128], index: 0, kind: input, shape index: {}]
  %s1 = inlined_call_operand.vmem [shape: f32[1,128], index: 1, kind: input, shape index: {}]
  %s2 = inlined_call_operand.vmem [shape: f32[1,128], index: 2, kind: input, shape index: {}]
  %s3 = inlined_call_operand.hbm [shape: f32[128,128], index: 3, kind: input, shape index: {}]
  %s4 = inlined_call_operand.hbm [shape: f32[4,128], index: 4, kind: output, shape index: {}]
  %s5 = sld [smem:[#allocation0]]
  $region34: #{tpu_custom_call.1} parent=0
    _
  %s7 = ssub.s32 1, %s5
  %s8 = scalar_select 0, %s7, %s5
  $region1: #{tpu_custom_call.1} parent=0
    #allocation2 [shape = 'u8[4096]{0}', space=vmem, size = 0x1000, scoped, tag = 'input window, operand 0, single buffered']
    #allocation3 [shape = 's32[1]{0}', space=sflag, size = 0x4, scoped, tag = 'scoped memory for tpu_custom_call.1']
    #allocation4 [shape = 's32[1]{0}', space=sflag, size = 0x4, scoped, tag = 'scoped memory for tpu_custom_call.1']
    #allocation5 [shape = 'u8[65536]{0}', space=vmem, size = 0x10000, scoped, tag = 'input window, operand 3, single buffered']
    #allocation6 [shape = 's32[1]{0}', space=sflag, size = 0x4, scoped, tag = 'scoped memory for tpu_custom_call.1']
    #allocation7 [shape = 'u8[4096]{0}', space=vmem, size = 0x1000, scoped, tag = 'output window, operand 0, single buffered']
    %9 = vsyncpa [#allocation3], 0
    %10 = vsyncpa [#allocation6], 0
    %11 = vsyncpa [#allocation4], 0
    // Predicated region
    $region2: #{tpu_custom_call.1} parent=1 // pred_check
      _
    $region3: #{tpu_custom_call.1} parent=1 // pred_check_branch
      %13 = sbr.rel (0) target = $region5
    $region4: #{tpu_custom_call.1} parent=1 // pred_region
      %s15 = ssub.s32 128, 64
      %16 = vsyncadd [#allocation3], %s15
      %s17 = sshll.u32 [#allocation2], 4
      %s18 = int_to_ptr.vmem [resolvable:$true] %s17
      %23 = dma.hbm_to_vmem [thread:$0]  %s0, 64, %s18, [#allocation3], 64, 64, 4
    $region5: #{tpu_custom_call.1} parent=1 // pred_fallthru
      _
    // Predicated region
    $region6: #{tpu_custom_call.1} parent=1 // pred_check
      _
    $region7: #{tpu_custom_call.1} parent=1 // pred_check_branch
      %25 = sbr.rel (0) target = $region9
    $region8: #{tpu_custom_call.1} parent=1 // pred_region
      _
    $region9: #{tpu_custom_call.1} parent=1 // pred_fallthru
      _
    // Predicated region
    $region10: #{tpu_custom_call.1} parent=1 // pred_check
      _
    $region11: #{tpu_custom_call.1} parent=1 // pred_check_branch
      %27 = sbr.rel (0) target = $region13
    $region12: #{tpu_custom_call.1} parent=1 // pred_region
      _
    $region13: #{tpu_custom_call.1} parent=1 // pred_fallthru
      _
    // Predicated region
    $region14: #{tpu_custom_call.1} parent=1 // pred_check
      _
    $region15: #{tpu_custom_call.1} parent=1 // pred_check_branch
      %29 = sbr.rel (0) target = $region17
    $region16: #{tpu_custom_call.1} parent=1 // pred_region
      %s31 = ssub.s32 2048, 2048
      %32 = vsyncadd [#allocation6], %s31
      %s33 = sshll.u32 [#allocation5], 4
      %s34 = int_to_ptr.vmem [resolvable:$true] %s33
      %39 = dma.hbm_to_vmem [thread:$0]  %s3, 2048, %s34, [#allocation6], 128, 128, 8
    $region17: #{tpu_custom_call.1} parent=1 // pred_fallthru
      _
    // Predicated region
    $region18: #{tpu_custom_call.1} parent=1 // pred_check
      _
    $region19: #{tpu_custom_call.1} parent=1 // pred_check_branch
      %41 = sbr.rel (0) target = $region21
    $region20: #{tpu_custom_call.1} parent=1 // pred_region
      %42 = dma.done [#allocation3], 128
    $region21: #{tpu_custom_call.1} parent=1 // pred_fallthru
      _
    // Predicated region
    $region22: #{tpu_custom_call.1} parent=1 // pred_check
      _
    $region23: #{tpu_custom_call.1} parent=1 // pred_check_branch
      %44 = sbr.rel (0) target = $region25
    $region24: #{tpu_custom_call.1} parent=1 // pred_region
      %45 = dma.done [#allocation6], 2048
    $region25: #{tpu_custom_call.1} parent=1 // pred_fallthru
      _
    %v46 = vld [vmem:[#allocation2] sm:$0xff]
    %v47 = vld [vmem:[#allocation5] sm:$0xff]
    %v48 = vld [vmem:[#allocation5 + $0x8] sm:$0xff]
    %v49 = vld [vmem:[#allocation5 + $0x10] sm:$0xff]
    %v50 = vld [vmem:[#allocation5 + $0x18] sm:$0xff]
    %v51 = vld [vmem:[#allocation5 + $0x20] sm:$0xff]
    %v52 = vld [vmem:[#allocation5 + $0x28] sm:$0xff]
    %v53 = vld [vmem:[#allocation5 + $0x30] sm:$0xff]
    %v54 = vld [vmem:[#allocation5 + $0x38] sm:$0xff]
    %v55 = vld [vmem:[#allocation5 + $0x40] sm:$0xff]
    %v56 = vld [vmem:[#allocation5 + $0x48] sm:$0xff]
    %v57 = vld [vmem:[#allocation5 + $0x50] sm:$0xff]
    %v58 = vld [vmem:[#allocation5 + $0x58] sm:$0xff]
    %v59 = vld [vmem:[#allocation5 + $0x60] sm:$0xff]
    %v60 = vld [vmem:[#allocation5 + $0x68] sm:$0xff]
    %v61 = vld [vmem:[#allocation5 + $0x70] sm:$0xff]
    %v62 = vld [vmem:[#allocation5 + $0x78] sm:$0xff]
    %63 = vmatprep.subr.mxu0 0.0
    %64 = vmatpush1.msra.mxu0 %v47
    %65 = vmatprep.subr.mxu0 0.0
    %66 = vmatpush1.msra.mxu0 %v48
    %67 = vmatprep.subr.mxu0 0.0
    %68 = vmatpush1.msra.mxu0 %v49
    %69 = vmatprep.subr.mxu0 0.0
    %70 = vmatpush1.msra.mxu0 %v50
    %71 = vmatprep.subr.mxu0 0.0
    %72 = vmatpush1.msra.mxu0 %v51
    %73 = vmatprep.subr.mxu0 0.0
    %74 = vmatpush1.msra.mxu0 %v52
    %75 = vmatprep.subr.mxu0 0.0
    %76 = vmatpush1.msra.mxu0 %v53
    %77 = vmatprep.subr.mxu0 0.0
    %78 = vmatpush1.msra.mxu0 %v54
    %79 = vmatprep.subr.mxu0 0.0
    %80 = vmatpush1.msra.mxu0 %v55
    %81 = vmatprep.subr.mxu0 0.0
    %82 = vmatpush1.msra.mxu0 %v56
    %83 = vmatprep.subr.mxu0 0.0
    %84 = vmatpush1.msra.mxu0 %v57
    %85 = vmatprep.subr.mxu0 0.0
    %86 = vmatpush1.msra.mxu0 %v58
    %87 = vmatprep.subr.mxu0 0.0
    %88 = vmatpush1.msra.mxu0 %v59
    %89 = vmatprep.subr.mxu0 0.0
    %90 = vmatpush1.msra.mxu0 %v60
    %91 = vmatprep.subr.mxu0 0.0
    %92 = vmatpush1.msra.mxu0 %v61
    %93 = vmatprep.subr.mxu0 0.0
    %94 = vmatpush1.msra.mxu0 %v62
    %95 = vmatprep.subr.mxu0 0.0
    %96 = vmatpush1.msra.mxu0 0.0
    %97 = vmatprep.subr.mxu0 0.0
    %98 = vmatpush1.msra.mxu0 0.0
    %99 = vmatprep.subr.mxu0 0.0
    %100 = vmatpush1.msra.mxu0 0.0
    %101 = vmatprep.subr.mxu0 0.0
    %102 = vmatpush1.msra.mxu0 0.0
    %103 = vmatprep.subr.mxu0 0.0
    %104 = vmatpush1.msra.mxu0 0.0
    %105 = vmatprep.subr.mxu0 0.0
    %106 = vmatpush1.msra.mxu0 0.0
    %107 = vmatprep.subr.mxu0 0.0
    %108 = vmatpush1.msra.mxu0 0.0
    %109 = vmatprep.subr.mxu0 0.0
    %110 = vmatpush1.msra.mxu0 0.0
    %111 = vmatprep.subr.mxu0 0.0
    %112 = vmatpush1.msra.mxu0 0.0
    %113 = vmatprep.subr.mxu0 0.0
    %114 = vmatpush1.msra.mxu0 0.0
    %115 = vmatprep.subr.mxu0 0.0
    %116 = vmatpush1.msra.mxu0 0.0
    %117 = vmatprep.subr.mxu0 0.0
    %118 = vmatpush1.msra.mxu0 0.0
    %119 = vmatprep.subr.mxu0 0.0
    %120 = vmatpush1.msra.mxu0 0.0
    %121 = vmatprep.subr.mxu0 0.0
    %122 = vmatpush1.msra.mxu0 0.0
    %123 = vmatprep.subr.mxu0 0.0
    %124 = vmatpush1.msra.mxu0 0.0
    %125 = vmatprep.subr.mxu0 0.0
    %126 = vmatpush1.msra.mxu0 0.0
    %127 = vmatprep.mubr.f32.mxu0 0.0
    %128 = vmatmul.mubr.f32.gmra.mrb[0].mxu0 %v46
    %v129 = vpop.f32.mrb[0].mxu0
    %v130 = vadd.f32 0.0, %v129
    %v131 = vpop.f32.mrb[0].mxu0
    %132 = vdwg.mxu0
    %v133 = vmul.f32 %v130, 0.03125
    %v134 = vmul.f32 %v46, %v46
    %135 = vmatprep.subr.mxu0 0.0
    %136 = vmatpush1.msra.mxu0 %v47
    %137 = vmatprep.subr.mxu0 0.0
    %138 = vmatpush1.msra.mxu0 %v48
    %139 = vmatprep.subr.mxu0 0.0
    %140 = vmatpush1.msra.mxu0 %v49
    %141 = vmatprep.subr.mxu0 0.0
    %142 = vmatpush1.msra.mxu0 %v50
    %143 = vmatprep.subr.mxu0 0.0
    %144 = vmatpush1.msra.mxu0 %v51
    %145 = vmatprep.subr.mxu0 0.0
    %146 = vmatpush1.msra.mxu0 %v52
    %147 = vmatprep.subr.mxu0 0.0
    %148 = vmatpush1.msra.mxu0 %v53
    %149 = vmatprep.subr.mxu0 0.0
    %150 = vmatpush1.msra.mxu0 %v54
    %151 = vmatprep.subr.mxu0 0.0
    %152 = vmatpush1.msra.mxu0 %v55
    %153 = vmatprep.subr.mxu0 0.0
    %154 = vmatpush1.msra.mxu0 %v56
    %155 = vmatprep.subr.mxu0 0.0
    %156 = vmatpush1.msra.mxu0 %v57
    %157 = vmatprep.subr.mxu0 0.0
    %158 = vmatpush1.msra.mxu0 %v58
    %159 = vmatprep.subr.mxu0 0.0
    %160 = vmatpush1.msra.mxu0 %v59
    %161 = vmatprep.subr.mxu0 0.0
    %162 = vmatpush1.msra.mxu0 %v60
    %163 = vmatprep.subr.mxu0 0.0
    %164 = vmatpush1.msra.mxu0 %v61
    %165 = vmatprep.subr.mxu0 0.0
    %166 = vmatpush1.msra.mxu0 %v62
    %167 = vmatprep.subr.mxu0 0.0
    %168 = vmatpush1.msra.mxu0 0.0
    %169 = vmatprep.subr.mxu0 0.0
    %170 = vmatpush1.msra.mxu0 0.0
    %171 = vmatprep.subr.mxu0 0.0
    %172 = vmatpush1.msra.mxu0 0.0
    %173 = vmatprep.subr.mxu0 0.0
    %174 = vmatpush1.msra.mxu0 0.0
    %175 = vmatprep.subr.mxu0 0.0
    %176 = vmatpush1.msra.mxu0 0.0
    %177 = vmatprep.subr.mxu0 0.0
    %178 = vmatpush1.msra.mxu0 0.0
    %179 = vmatprep.subr.mxu0 0.0
    %180 = vmatpush1.msra.mxu0 0.0
    %181 = vmatprep.subr.mxu0 0.0
    %182 = vmatpush1.msra.mxu0 0.0
    %183 = vmatprep.subr.mxu0 0.0
    %184 = vmatpush1.msra.mxu0 0.0
    %185 = vmatprep.subr.mxu0 0.0
    %186 = vmatpush1.msra.mxu0 0.0
    %187 = vmatprep.subr.mxu0 0.0
    %188 = vmatpush1.msra.mxu0 0.0
    %189 = vmatprep.subr.mxu0 0.0
    %190 = vmatpush1.msra.mxu0 0.0
    %191 = vmatprep.subr.mxu0 0.0
    %192 = vmatpush1.msra.mxu0 0.0
    %193 = vmatprep.subr.mxu0 0.0
    %194 = vmatpush1.msra.mxu0 0.0
    %195 = vmatprep.subr.mxu0 0.0
    %196 = vmatpush1.msra.mxu0 0.0
    %197 = vmatprep.subr.mxu0 0.0
    %198 = vmatpush1.msra.mxu0 0.0
    %199 = vmatprep.mubr.f32.mxu0 0.0
    %200 = vmatmul.mubr.f32.gmra.mrb[0].mxu0 %v134
    %v201 = vpop.f32.mrb[0].mxu0
    %v202 = vadd.f32 0.0, %v201
    %v203 = vpop.f32.mrb[0].mxu0
    %204 = vdwg.mxu0
    %v205 = vmul.f32 %v202, 0.03125
    %v206 = vmul.f32 %v133, %v133
    %v207 = vsub.f32 %v205, %v206
    %v208 = vmax.f32 %v207, 0.0
    %v209 = vsub.f32 %v46, %v133
    %v210 = vadd.f32 %v208, 1e-05
    %v211 = vrsqrt.pop %v210
    %v212 = vmul.f32 %v209, %v211
    %v213 = vld [vmem:[%s1] sm:$0x1]
    %v215 = vlaneseq
    %v216 = vshrl.u32 %v215, 7
    %v217 = vsub.s32 0, %v216
    %v218 = vrot.slane %v213, %v217
    %v220 = vmul.f32 %v212, %v218
    %v221 = vld [vmem:[%s2] sm:$0x1]
    %v223 = vlaneseq
    %v224 = vshrl.u32 %v223, 7
    %v225 = vsub.s32 0, %v224
    %v226 = vrot.slane %v221, %v225
    %v228 = vadd.f32 %v220, %v226
    %229 = vst [vmem:[#allocation7] sm:$0xff] %v228
    // Predicated region
    $region26: #{tpu_custom_call.1} parent=1 // pred_check
      _
    $region27: #{tpu_custom_call.1} parent=1 // pred_check_branch
      %231 = sbr.rel (0) target = $region29
    $region28: #{tpu_custom_call.1} parent=1 // pred_region
      %s233 = ssub.s32 128, 64
      %234 = vsyncadd [#allocation4], %s233
      %s235 = sshll.u32 [#allocation7], 4
      %s236 = int_to_ptr.vmem [resolvable:$true] %s235
      %241 = dma.vmem_to_hbm [thread:$0]  %s236, 64, %s4, [#allocation4], 64, 64, 4
    $region29: #{tpu_custom_call.1} parent=1 // pred_fallthru
      _
    // Predicated region
    $region30: #{tpu_custom_call.1} parent=1 // pred_check
      _
    $region31: #{tpu_custom_call.1} parent=1 // pred_check_branch
      %243 = sbr.rel (0) target = $region33
    $region32: #{tpu_custom_call.1} parent=1 // pred_region
      %244 = dma.done [#allocation4], 128
    $region33: #{tpu_custom_call.1} parent=1 // pred_fallthru
      _
    %245 = vsyncpa [#allocation3], 1
    %246 = vsyncpa [#allocation6], 1
    %247 = vsyncpa [#allocation4], 1

</llo_original>
